<compile_context>
chip_gen: v5e
topology: v5e:2x2
jax: 0.10.0
libtpu: 0.0.40
codegen_flags: <defaults>
</compile_context>

<pallas_src>
import math
import functools

import jax
import jax.numpy as jnp
from jax import lax
from jax.experimental import pallas as pl
from jax.experimental.pallas import tpu as pltpu


def _vmem_budget(est_bytes):
    # generous margin, clamped so it is valid on v5e/v6e (128 MiB) and v7x (64 MiB)
    return int(min(48 * 2**20, max(8 * 2**20, 4 * est_bytes)))


# --------------------------------------------------------------------------
# Kernel 1: fused Q/K/V projections (rows of the flattened (N*T, d_model) x).
# --------------------------------------------------------------------------
def _qkv_proj_kernel(xq_ref, xk_ref, xv_ref,
                     wq_ref, bq_ref, wk_ref, bk_ref, wv_ref, bv_ref,
                     q_out, k_out, v_out, *, compute_dtype):
    xq = xq_ref[...].astype(compute_dtype)
    xk = xk_ref[...].astype(compute_dtype)
    xv = xv_ref[...].astype(compute_dtype)
    q = jnp.dot(xq, wq_ref[...], preferred_element_type=jnp.float32) + bq_ref[...]
    k = jnp.dot(xk, wk_ref[...], preferred_element_type=jnp.float32) + bk_ref[...]
    v = jnp.dot(xv, wv_ref[...], preferred_element_type=jnp.float32) + bv_ref[...]
    q_out[...] = q.astype(q_out.dtype)
    k_out[...] = k.astype(k_out.dtype)
    v_out[...] = v.astype(v_out.dtype)


# --------------------------------------------------------------------------
# Kernel 2: flash-style causal attention + fused output projection.
# --------------------------------------------------------------------------
def _flash_attn_kernel(q_ref, k_ref, v_ref, wfc_ref, bfc_ref, out_ref,
                       m_ref, l_ref, acc_ref, *,
                       n_heads, d_k, blk, compute_dtype):
    qi = pl.program_id(1)
    ki = pl.program_id(2)

    @pl.when(ki == 0)
    def _init():
        m_ref[...] = jnp.full(m_ref.shape, -1e30, jnp.float32)
        l_ref[...] = jnp.zeros(l_ref.shape, jnp.float32)
        acc_ref[...] = jnp.zeros(acc_ref.shape, jnp.float32)

    @pl.when(ki <= qi)  # causal: kv tiles strictly above the diagonal skipped
    def _compute():
        qt = q_ref[0]    # (blk, d_h); 1/sqrt(d_k) already folded into Q
        kt = k_ref[0]
        vt = v_ref[0]
        row = lax.broadcasted_iota(jnp.int32, (blk, blk), 0)
        col = lax.broadcasted_iota(jnp.int32, (blk, blk), 1)
        # Only the diagonal tile needs masking; below-diagonal tiles get 0 bias.
        bias = jnp.where((row >= col) | (ki < qi), 0.0, -1e30).astype(jnp.float32)

        for h in range(n_heads):            # static unroll over heads
            lo, hi = h * d_k, (h + 1) * d_k
            # (blk, d_k) x (blk, d_k) contracting d_k  ->  (blk, blk)
            s = lax.dot_general(qt[:, lo:hi], kt[:, lo:hi],
                                (((1,), (1,)), ((), ())),
                                preferred_element_type=jnp.float32)
            s = s + bias
            m_prev = m_ref[h]                                    # (blk, 1)
            m_new = jnp.maximum(m_prev, jnp.max(s, axis=-1, keepdims=True))
            alpha = jnp.exp(m_prev - m_new)
            p = jnp.exp(s - m_new)                               # (blk, blk) f32
            l_ref[h] = alpha * l_ref[h] + jnp.sum(p, axis=-1, keepdims=True)
            pv = jnp.dot(p.astype(compute_dtype), vt[:, lo:hi],
                         preferred_element_type=jnp.float32)     # (blk, d_k)
            acc_ref[:, lo:hi] = alpha * acc_ref[:, lo:hi] + pv
            m_ref[h] = m_new

    @pl.when(ki == qi)  # last contributing kv tile for this q tile: finalize
    def _finalize():
        for h in range(n_heads):
            lo, hi = h * d_k, (h + 1) * d_k
            inv = pl.reciprocal(l_ref[h], approx=True)
            acc_ref[:, lo:hi] = acc_ref[:, lo:hi] * inv
        a = acc_ref[...].astype(compute_dtype)                   # (blk, d_h)
        out = jnp.dot(a, wfc_ref[...],
                      preferred_element_type=jnp.float32) + bfc_ref[...]
        out_ref[0] = out.astype(out_ref.dtype)


# --------------------------------------------------------------------------
# Wrapper
# --------------------------------------------------------------------------
def causal_self_attention(q, k, v, params, *, n_heads, d_k,
                          compute_dtype=jnp.bfloat16):
    """q, k, v: (N, T, d_model) float32.  Returns (N, T, d_model)."""
    N, T, d_model = q.shape
    d_h = n_heads * d_k
    cdt = compute_dtype
    scale = 1.0 / math.sqrt(d_k)

    # Pre-transpose once in the wrapper (no XLU transposes in-kernel) and fold
    # the attention scale into the query projection weights + bias.
    wq_t = (params['wq'].T * scale).astype(cdt)      # (d_model, d_h)
    wk_t = params['wk'].T.astype(cdt)
    wv_t = params['wv'].T.astype(cdt)
    wfc_t = params['wfc'].T.astype(cdt)              # (d_h, d_model)
    bq2 = (params['bq'] * scale).reshape(1, d_h).astype(jnp.float32)
    bk2 = params['bk'].reshape(1, d_h).astype(jnp.float32)
    bv2 = params['bv'].reshape(1, d_h).astype(jnp.float32)
    bfc2 = params['bfc'].reshape(1, d_model).astype(jnp.float32)

    # ----------------- QKV projections -----------------
    R = N * T
    xq = q.reshape(R, d_model)
    xk = k.reshape(R, d_model)
    xv = v.reshape(R, d_model)
    tr = R if R <= 512 else 512                       # row tile (mult. of 8)

    x_spec = pl.BlockSpec((tr, d_model), lambda i: (i, 0))
    w_spec = pl.BlockSpec((d_model, d_h), lambda i: (0, 0))
    b_spec = pl.BlockSpec((1, d_h), lambda i: (0, 0))
    o_spec = pl.BlockSpec((tr, d_h), lambda i: (i, 0))

    proj_est = (3 * 2 * tr * d_model * 4 + 3 * 2 * d_model * d_h * 2
                + 3 * 2 * d_h * 4 + 3 * 2 * tr * d_h * 2)
    Q, K, V = pl.pallas_call(
        functools.partial(_qkv_proj_kernel, compute_dtype=cdt),
        out_shape=(jax.ShapeDtypeStruct((R, d_h), cdt),
                   jax.ShapeDtypeStruct((R, d_h), cdt),
                   jax.ShapeDtypeStruct((R, d_h), cdt)),
        grid_spec=pltpu.PrefetchScalarGridSpec(
            num_scalar_prefetch=0,
            grid=(pl.cdiv(R, tr),),
            in_specs=[x_spec, x_spec, x_spec,
                      w_spec, b_spec, w_spec, b_spec, w_spec, b_spec],
            out_specs=[o_spec, o_spec, o_spec]),
        compiler_params=pltpu.CompilerParams(
            dimension_semantics=("parallel",),
            vmem_limit_bytes=_vmem_budget(proj_est)),
    )(xq, xk, xv, wq_t, bq2, wk_t, bk2, wv_t, bv2)
    Q = Q.reshape(N, T, d_h)
    K = K.reshape(N, T, d_h)
    V = V.reshape(N, T, d_h)

    # ----------------- Flash attention + output projection -----------------
    blk = 128 if T % 128 == 0 else T                  # kv == q tile size
    n_q = T // blk

    q_spec = pl.BlockSpec((1, blk, d_h), lambda n, qi, ki: (n, qi, 0))
    # Clamp ki to qi: fully-masked kv tiles reuse the diagonal block index so
    # their HBM->VMEM DMAs are deduped; compute is skipped via pl.when anyway.
    kv_spec = pl.BlockSpec((1, blk, d_h),
                           lambda n, qi, ki: (n, jnp.minimum(ki, qi), 0))
    wfc_spec = pl.BlockSpec((d_h, d_model), lambda n, qi, ki: (0, 0))
    bfc_spec = pl.BlockSpec((1, d_model), lambda n, qi, ki: (0, 0))
    out_spec = pl.BlockSpec((1, blk, d_model), lambda n, qi, ki: (n, qi, 0))

    flash_est = (3 * 2 * blk * d_h * 2            # q,k,v double-buffered (bf16)
                 + 2 * d_h * d_model * 2          # wfc
                 + 2 * d_model * 4                # bfc
                 + 2 * blk * d_model * 4          # out double-buffered (f32)
                 + (2 * n_heads * blk + blk * d_h) * 4   # m, l, acc scratch
                 + n_heads * blk * blk * 4)       # per-head score temporaries

    out = pl.pallas_call(
        functools.partial(_flash_attn_kernel, n_heads=n_heads, d_k=d_k,
                          blk=blk, compute_dtype=cdt),
        out_shape=jax.ShapeDtypeStruct((N, T, d_model), q.dtype),
        grid_spec=pltpu.PrefetchScalarGridSpec(
            num_scalar_prefetch=0,
            grid=(N, n_q, n_q),
            in_specs=[q_spec, kv_spec, kv_spec, wfc_spec, bfc_spec],
            out_specs=out_spec,
            scratch_shapes=[pltpu.VMEM((n_heads, blk, 1), jnp.float32),   # m
                            pltpu.VMEM((n_heads, blk, 1), jnp.float32),   # l
                            pltpu.VMEM((blk, d_h), jnp.float32)]),        # acc
        compiler_params=pltpu.CompilerParams(
            dimension_semantics=("parallel", "parallel", "arbitrary"),
            vmem_limit_bytes=_vmem_budget(flash_est)),
    )(Q, K, V, wfc_t, bfc2)
    return out


# --------------------------------------------------------------------------
# Pure-JAX reference (mirrors the PyTorch forward, pad_mask=None), f32.
# --------------------------------------------------------------------------
def _reference(q, k, v, params, *, n_heads, d_k):
    N, T, _ = q.shape
    lin = lambda x, w, b: x @ w.T + b
    Q = lin(q, params['wq'], params['bq']).reshape(N, T, n_heads, d_k).transpose(0, 2, 1, 3)
    K = lin(k, params['wk'], params['bk']).reshape(N, T, n_heads, d_k).transpose(0, 2, 1, 3)
    V = lin(v, params['wv'], params['bv']).reshape(N, T, n_heads, d_k).transpose(0, 2, 1, 3)
    s = Q @ K.transpose(0, 1, 3, 2) / math.sqrt(d_k)
    causal = jnp.tril(jnp.ones((T, T), bool))
    s = jnp.where(causal[None, None], s, -jnp.inf)
    w = jax.nn.softmax(s, axis=-1)
    A = (w @ V).transpose(0, 2, 1, 3).reshape(N, T, n_heads * d_k)
    return lin(A, params['wfc'], params['bfc'])


if __name__ == "__main__":
    # Small shapes consistent with the module's forward.
    N, T = 2, 8
    n_heads, d_k = 4, 8
    d_model = 32
    d_h = n_heads * d_k

    key = jax.random.PRNGKey(0)
    ks = jax.random.split(key, 12)

    def init_linear(kw, kb, out_f, in_f):
        bound = 1.0 / math.sqrt(in_f)
        w = jax.random.uniform(kw, (out_f, in_f), jnp.float32, -bound, bound)
        b = jax.random.uniform(kb, (out_f,), jnp.float32, -bound, bound)
        return w, b

    wq, bq = init_linear(ks[0], ks[1], d_h, d_model)
    wk, bk = init_linear(ks[2], ks[3], d_h, d_model)
    wv, bv = init_linear(ks[4], ks[5], d_h, d_model)
    wfc, bfc = init_linear(ks[6], ks[7], d_model, d_h)
    params = dict(wq=wq, bq=bq, wk=wk, bk=bk, wv=wv, bv=bv, wfc=wfc, bfc=bfc)

    q = jax.random.normal(ks[8], (N, T, d_model), jnp.float32)
    k = jax.random.normal(ks[9], (N, T, d_model), jnp.float32)
    v = jax.random.normal(ks[10], (N, T, d_model), jnp.float32)

    out = causal_self_attention(q, k, v, params, n_heads=n_heads, d_k=d_k)
    out = jax.block_until_ready(out)

    ref = _reference(q, k, v, params, n_heads=n_heads, d_k=d_k)
    assert out.shape == (N, T, d_model)
    # bf16 MXU operands + approx reciprocal -> loose-ish tolerance vs f32 ref.
    assert jnp.allclose(out, ref, atol=5e-2, rtol=5e-2), \
        float(jnp.max(jnp.abs(out - ref)))

    print("KERNEL_OK")
</pallas_src>

<mosaic_0001>
module attributes {stable_mosaic.version = 11 : i64} {
  func.func @_qkv_proj_kernel(%arg0: i32, %arg1: memref<16x32xf32, #tpu.memory_space<vmem>>, %arg2: memref<16x32xf32, #tpu.memory_space<vmem>>, %arg3: memref<16x32xf32, #tpu.memory_space<vmem>>, %arg4: memref<32x32xbf16, #tpu.memory_space<vmem>>, %arg5: memref<1x32xf32, #tpu.memory_space<vmem>>, %arg6: memref<32x32xbf16, #tpu.memory_space<vmem>>, %arg7: memref<1x32xf32, #tpu.memory_space<vmem>>, %arg8: memref<32x32xbf16, #tpu.memory_space<vmem>>, %arg9: memref<1x32xf32, #tpu.memory_space<vmem>>, %arg10: memref<16x32xbf16, #tpu.memory_space<vmem>>, %arg11: memref<16x32xbf16, #tpu.memory_space<vmem>>, %arg12: memref<16x32xbf16, #tpu.memory_space<vmem>>) attributes {dimension_semantics = [#tpu.dimension_semantics<parallel>], iteration_bounds = array<i64: 1>, scalar_prefetch = 0 : i64, scratch_operands = 0 : i64, tpu.core_type = #tpu.core_type<tc>, window_params = [{transform_indices = @transform_0, window_bounds = array<i64: 16, 32>}, {transform_indices = @transform_1, window_bounds = array<i64: 16, 32>}, {transform_indices = @transform_2, window_bounds = array<i64: 16, 32>}, {pipeline_mode = #tpu.pipeline_mode<synchronous>, transform_indices = @transform_3, window_bounds = array<i64: 32, 32>}, {pipeline_mode = #tpu.pipeline_mode<synchronous>, transform_indices = @transform_4, window_bounds = array<i64: 1, 32>}, {pipeline_mode = #tpu.pipeline_mode<synchronous>, transform_indices = @transform_5, window_bounds = array<i64: 32, 32>}, {pipeline_mode = #tpu.pipeline_mode<synchronous>, transform_indices = @transform_6, window_bounds = array<i64: 1, 32>}, {pipeline_mode = #tpu.pipeline_mode<synchronous>, transform_indices = @transform_7, window_bounds = array<i64: 32, 32>}, {pipeline_mode = #tpu.pipeline_mode<synchronous>, transform_indices = @transform_8, window_bounds = array<i64: 1, 32>}, {transform_indices = @transform_9, window_bounds = array<i64: 16, 32>}, {transform_indices = @transform_10, window_bounds = array<i64: 16, 32>}, {transform_indices = @transform_11, window_bounds = array<i64: 16, 32>}]} {
    %c0 = arith.constant 0 : index
    %c0_0 = arith.constant 0 : index
    %0 = vector.load %arg1[%c0, %c0_0] : memref<16x32xf32, #tpu.memory_space<vmem>>, vector<16x32xf32>
    %1 = arith.truncf %0 : vector<16x32xf32> to vector<16x32xbf16>
    %c0_1 = arith.constant 0 : index
    %c0_2 = arith.constant 0 : index
    %2 = vector.load %arg2[%c0_1, %c0_2] : memref<16x32xf32, #tpu.memory_space<vmem>>, vector<16x32xf32>
    %3 = arith.truncf %2 : vector<16x32xf32> to vector<16x32xbf16>
    %c0_3 = arith.constant 0 : index
    %c0_4 = arith.constant 0 : index
    %4 = vector.load %arg3[%c0_3, %c0_4] : memref<16x32xf32, #tpu.memory_space<vmem>>, vector<16x32xf32>
    %5 = arith.truncf %4 : vector<16x32xf32> to vector<16x32xbf16>
    %c0_5 = arith.constant 0 : index
    %c0_6 = arith.constant 0 : index
    %6 = vector.load %arg4[%c0_5, %c0_6] : memref<32x32xbf16, #tpu.memory_space<vmem>>, vector<32x32xbf16>
    %cst = arith.constant dense<0.000000e+00> : vector<16x32xf32>
    %7 = tpu.matmul %1, %6, %cst {dimension_numbers = #tpu.dot_dimension_numbers<[1], [0], [0], [1], [0, 0, 1, 1], [], []>} : vector<16x32xbf16>, vector<32x32xbf16>, vector<16x32xf32> -> vector<16x32xf32>
    %c0_7 = arith.constant 0 : index
    %c0_8 = arith.constant 0 : index
    %8 = vector.load %arg5[%c0_7, %c0_8] : memref<1x32xf32, #tpu.memory_space<vmem>>, vector<1x32xf32>
    %9 = vector.broadcast %8 : vector<1x32xf32> to vector<16x32xf32>
    %10 = arith.addf %7, %9 : vector<16x32xf32>
    %c0_9 = arith.constant 0 : index
    %c0_10 = arith.constant 0 : index
    %11 = vector.load %arg6[%c0_9, %c0_10] : memref<32x32xbf16, #tpu.memory_space<vmem>>, vector<32x32xbf16>
    %cst_11 = arith.constant dense<0.000000e+00> : vector<16x32xf32>
    %12 = tpu.matmul %3, %11, %cst_11 {dimension_numbers = #tpu.dot_dimension_numbers<[1], [0], [0], [1], [0, 0, 1, 1], [], []>} : vector<16x32xbf16>, vector<32x32xbf16>, vector<16x32xf32> -> vector<16x32xf32>
    %c0_12 = arith.constant 0 : index
    %c0_13 = arith.constant 0 : index
    %13 = vector.load %arg7[%c0_12, %c0_13] : memref<1x32xf32, #tpu.memory_space<vmem>>, vector<1x32xf32>
    %14 = vector.broadcast %13 : vector<1x32xf32> to vector<16x32xf32>
    %15 = arith.addf %12, %14 : vector<16x32xf32>
    %c0_14 = arith.constant 0 : index
    %c0_15 = arith.constant 0 : index
    %16 = vector.load %arg8[%c0_14, %c0_15] : memref<32x32xbf16, #tpu.memory_space<vmem>>, vector<32x32xbf16>
    %cst_16 = arith.constant dense<0.000000e+00> : vector<16x32xf32>
    %17 = tpu.matmul %5, %16, %cst_16 {dimension_numbers = #tpu.dot_dimension_numbers<[1], [0], [0], [1], [0, 0, 1, 1], [], []>} : vector<16x32xbf16>, vector<32x32xbf16>, vector<16x32xf32> -> vector<16x32xf32>
    %c0_17 = arith.constant 0 : index
    %c0_18 = arith.constant 0 : index
    %18 = vector.load %arg9[%c0_17, %c0_18] : memref<1x32xf32, #tpu.memory_space<vmem>>, vector<1x32xf32>
    %19 = vector.broadcast %18 : vector<1x32xf32> to vector<16x32xf32>
    %20 = arith.addf %17, %19 : vector<16x32xf32>
    %21 = arith.truncf %10 : vector<16x32xf32> to vector<16x32xbf16>
    %c0_19 = arith.constant 0 : index
    %c0_20 = arith.constant 0 : index
    %22 = vector.load %arg10[%c0_19, %c0_20] : memref<16x32xbf16, #tpu.memory_space<vmem>>, vector<16x32xbf16>
    tpu.vector_store %arg10[%c0_19, %c0_20], %21 {strides = array<i32>} : memref<16x32xbf16, #tpu.memory_space<vmem>>, vector<16x32xbf16>,
    %23 = arith.truncf %15 : vector<16x32xf32> to vector<16x32xbf16>
    %c0_21 = arith.constant 0 : index
    %c0_22 = arith.constant 0 : index
    %24 = vector.load %arg11[%c0_21, %c0_22] : memref<16x32xbf16, #tpu.memory_space<vmem>>, vector<16x32xbf16>
    tpu.vector_store %arg11[%c0_21, %c0_22], %23 {strides = array<i32>} : memref<16x32xbf16, #tpu.memory_space<vmem>>, vector<16x32xbf16>,
    %25 = arith.truncf %20 : vector<16x32xf32> to vector<16x32xbf16>
    %c0_23 = arith.constant 0 : index
    %c0_24 = arith.constant 0 : index
    %26 = vector.load %arg12[%c0_23, %c0_24] : memref<16x32xbf16, #tpu.memory_space<vmem>>, vector<16x32xbf16>
    tpu.vector_store %arg12[%c0_23, %c0_24], %25 {strides = array<i32>} : memref<16x32xbf16, #tpu.memory_space<vmem>>, vector<16x32xbf16>,
    return
  }
  func.func @transform_0(%arg0: i32) -> (i32, i32) {
    %c0_i32 = arith.constant 0 : i32
    %c0_i32_0 = arith.constant 0 : i32
    return %arg0, %c0_i32 : i32, i32
  }
  func.func @transform_1(%arg0: i32) -> (i32, i32) {
    %c0_i32 = arith.constant 0 : i32
    %c0_i32_0 = arith.constant 0 : i32
    return %arg0, %c0_i32 : i32, i32
  }
  func.func @transform_2(%arg0: i32) -> (i32, i32) {
    %c0_i32 = arith.constant 0 : i32
    %c0_i32_0 = arith.constant 0 : i32
    return %arg0, %c0_i32 : i32, i32
  }
  func.func @transform_3(%arg0: i32) -> (i32, i32) {
    %c0_i32 = arith.constant 0 : i32
    %c0_i32_0 = arith.constant 0 : i32
    %c0_i32_1 = arith.constant 0 : i32
    return %c0_i32, %c0_i32_0 : i32, i32
  }
  func.func @transform_4(%arg0: i32) -> (i32, i32) {
    %c0_i32 = arith.constant 0 : i32
    %c0_i32_0 = arith.constant 0 : i32
    %c0_i32_1 = arith.constant 0 : i32
    return %c0_i32, %c0_i32_0 : i32, i32
  }
  func.func @transform_5(%arg0: i32) -> (i32, i32) {
    %c0_i32 = arith.constant 0 : i32
    %c0_i32_0 = arith.constant 0 : i32
    %c0_i32_1 = arith.constant 0 : i32
    return %c0_i32, %c0_i32_0 : i32, i32
  }
  func.func @transform_6(%arg0: i32) -> (i32, i32) {
    %c0_i32 = arith.constant 0 : i32
    %c0_i32_0 = arith.constant 0 : i32
    %c0_i32_1 = arith.constant 0 : i32
    return %c0_i32, %c0_i32_0 : i32, i32
  }
  func.func @transform_7(%arg0: i32) -> (i32, i32) {
    %c0_i32 = arith.constant 0 : i32
    %c0_i32_0 = arith.constant 0 : i32
    %c0_i32_1 = arith.constant 0 : i32
    return %c0_i32, %c0_i32_0 : i32, i32
  }
  func.func @transform_8(%arg0: i32) -> (i32, i32) {
    %c0_i32 = arith.constant 0 : i32
    %c0_i32_0 = arith.constant 0 : i32
    %c0_i32_1 = arith.constant 0 : i32
    return %c0_i32, %c0_i32_0 : i32, i32
  }
  func.func @transform_9(%arg0: i32) -> (i32, i32) {
    %c0_i32 = arith.constant 0 : i32
    %c0_i32_0 = arith.constant 0 : i32
    return %arg0, %c0_i32 : i32, i32
  }
  func.func @transform_10(%arg0: i32) -> (i32, i32) {
    %c0_i32 = arith.constant 0 : i32
    %c0_i32_0 = arith.constant 0 : i32
    return %arg0, %c0_i32 : i32, i32
  }
  func.func @transform_11(%arg0: i32) -> (i32, i32) {
    %c0_i32 = arith.constant 0 : i32
    %c0_i32_0 = arith.constant 0 : i32
    return %arg0, %c0_i32 : i32, i32
  }
}

</mosaic_0001>

<llo_original>
// kernel: tpu_custom_call.1
$region0: #{tpu_custom_call.1}
  #allocation0 [shape = 'u32[]', space=smem, size = 0x4, offset = 0x4, fixed_abs, tag = 'smem constant byte address 0x4 - core index']
  #allocation1 [shape = 'u32[72,128]{1,0:T(1,128)}', space=vmem, size = 0x9000, scoped, tag = 'internal scratch']
  %s0 = inlined_call_operand.hbm [shape: f32[16,32], index: 0, kind: input, shape index: {}]
  %s1 = inlined_call_operand.hbm [shape: f32[16,32], index: 1, kind: input, shape index: {}]
  %s2 = inlined_call_operand.hbm [shape: f32[16,32], index: 2, kind: input, shape index: {}]
  %s3 = inlined_call_operand.hbm [shape: bf16[32,32], index: 3, kind: input, shape index: {}]
  %s4 = inlined_call_operand.vmem [shape: f32[1,32], index: 4, kind: input, shape index: {}]
  %s5 = inlined_call_operand.hbm [shape: bf16[32,32], index: 5, kind: input, shape index: {}]
  %s6 = inlined_call_operand.vmem [shape: f32[1,32], index: 6, kind: input, shape index: {}]
  %s7 = inlined_call_operand.hbm [shape: bf16[32,32], index: 7, kind: input, shape index: {}]
  %s8 = inlined_call_operand.vmem [shape: f32[1,32], index: 8, kind: input, shape index: {}]
  %s9 = inlined_call_operand.hbm [shape: bf16[16,32], index: 9, kind: output, shape index: {0}]
  %s10 = inlined_call_operand.hbm [shape: bf16[16,32], index: 10, kind: output, shape index: {1}]
  %s11 = inlined_call_operand.hbm [shape: bf16[16,32], index: 11, kind: output, shape index: {2}]
  %12 = xla_tuple %s9, %s10, %s11
  %s13 = sld [smem:[#allocation0]]
  $region86: #{tpu_custom_call.1} parent=0
    _
  %s15 = ssub.s32 1, %s13
  %s16 = scalar_select 0, %s15, %s13
  $region1: #{tpu_custom_call.1} parent=0
    #allocation2 [shape = 'u8[8192]{0}', space=vmem, size = 0x2000, scoped, tag = 'input window, operand 0, single buffered']
    #allocation3 [shape = 's32[1]{0}', space=sflag, size = 0x4, scoped, tag = 'scoped memory for tpu_custom_call.1']
    #allocation4 [shape = 's32[1]{0}', space=sflag, size = 0x4, scoped, tag = 'scoped memory for tpu_custom_call.1']
    #allocation5 [shape = 'u8[8192]{0}', space=vmem, size = 0x2000, scoped, tag = 'input window, operand 1, single buffered']
    #allocation6 [shape = 's32[1]{0}', space=sflag, size = 0x4, scoped, tag = 'scoped memory for tpu_custom_call.1']
    #allocation7 [shape = 'u8[8192]{0}', space=vmem, size = 0x2000, scoped, tag = 'input window, operand 2, single buffered']
    #allocation8 [shape = 'u8[8192]{0}', space=vmem, size = 0x2000, scoped, tag = 'input window, operand 3, single buffered']
    #allocation9 [shape = 's32[1]{0}', space=sflag, size = 0x4, scoped, tag = 'scoped memory for tpu_custom_call.1']
    #allocation10 [shape = 'u8[8192]{0}', space=vmem, size = 0x2000, scoped, tag = 'input window, operand 5, single buffered']
    #allocation11 [shape = 'u8[8192]{0}', space=vmem, size = 0x2000, scoped, tag = 'input window, operand 7, single buffered']
    #allocation12 [shape = 's32[1]{0}', space=sflag, size = 0x4, scoped, tag = 'scoped memory for tpu_custom_call.1']
    #allocation13 [shape = 'u8[4096]{0}', space=vmem, size = 0x1000, scoped, tag = 'output window, operand 0, single buffered']
    #allocation14 [shape = 'u8[4096]{0}', space=vmem, size = 0x1000, scoped, tag = 'output window, operand 1, single buffered']
    #allocation15 [shape = 's32[1]{0}', space=sflag, size = 0x4, scoped, tag = 'scoped memory for tpu_custom_call.1']
    #allocation16 [shape = 'u8[4096]{0}', space=vmem, size = 0x1000, scoped, tag = 'output window, operand 2, single buffered']
    %17 = vsyncpa [#allocation3], 0
    %18 = vsyncpa [#allocation6], 0
    %19 = vsyncpa [#allocation9], 0
    %20 = vsyncpa [#allocation12], 0
    %21 = vsyncpa [#allocation4], 0
    %22 = vsyncpa [#allocation15], 0
    // Predicated region
    $region2: #{tpu_custom_call.1} parent=1 // pred_check
      _
    $region3: #{tpu_custom_call.1} parent=1 // pred_check_branch
      %24 = sbr.rel (0) target = $region5
    $region4: #{tpu_custom_call.1} parent=1 // pred_region
      %26 = vsyncadd [#allocation3], 0
      %s27 = sshll.u32 %s0, 4
      %s28 = int_to_ptr.hbm [resolvable:$true] %s27
      %s29 = sshll.u32 [#allocation2], 4
      %s30 = int_to_ptr.vmem [resolvable:$true] %s29
      %35 = dma.hbm_to_vmem [thread:$0]  %s28, 256, %s30, [#allocation3], 128, 128, 8
    $region5: #{tpu_custom_call.1} parent=1 // pred_fallthru
      _
    // Predicated region
    $region6: #{tpu_custom_call.1} parent=1 // pred_check
      _
    $region7: #{tpu_custom_call.1} parent=1 // pred_check_branch
      %37 = sbr.rel (0) target = $region9
    $region8: #{tpu_custom_call.1} parent=1 // pred_region
      %39 = vsyncadd [#allocation6], 0
      %s40 = sshll.u32 %s1, 4
      %s41 = int_to_ptr.hbm [resolvable:$true] %s40
      %s42 = sshll.u32 [#allocation5], 4
      %s43 = int_to_ptr.vmem [resolvable:$true] %s42
      %48 = dma.hbm_to_vmem [thread:$0]  %s41, 256, %s43, [#allocation6], 128, 128, 8
    $region9: #{tpu_custom_call.1} parent=1 // pred_fallthru
      _
    // Predicated region
    $region10: #{tpu_custom_call.1} parent=1 // pred_check
      _
    $region11: #{tpu_custom_call.1} parent=1 // pred_check_branch
      %50 = sbr.rel (0) target = $region13
    $region12: #{tpu_custom_call.1} parent=1 // pred_region
      %52 = vsyncadd [#allocation6], 0
      %s53 = sshll.u32 %s2, 4
      %s54 = int_to_ptr.hbm [resolvable:$true] %s53
      %s55 = sshll.u32 [#allocation7], 4
      %s56 = int_to_ptr.vmem [resolvable:$true] %s55
      %61 = dma.hbm_to_vmem [thread:$0]  %s54, 256, %s56, [#allocation6], 128, 128, 8
    $region13: #{tpu_custom_call.1} parent=1 // pred_fallthru
      _
    // Predicated region
    $region14: #{tpu_custom_call.1} parent=1 // pred_check
      _
    $region15: #{tpu_custom_call.1} parent=1 // pred_check_branch
      %63 = sbr.rel (0) target = $region17
    $region16: #{tpu_custom_call.1} parent=1 // pred_region
      %65 = vsyncadd [#allocation9], 0
      %s66 = sshll.u32 %s3, 4
      %s67 = int_to_ptr.hbm [resolvable:$true] %s66
      %s68 = sshll.u32 [#allocation8], 4
      %s69 = int_to_ptr.vmem [resolvable:$true] %s68
      %74 = dma.hbm_to_vmem [thread:$0]  %s67, 256, %s69, [#allocation9], 64, 64, 4
    $region17: #{tpu_custom_call.1} parent=1 // pred_fallthru
      _
    // Predicated region
    $region18: #{tpu_custom_call.1} parent=1 // pred_check
      _
    $region19: #{tpu_custom_call.1} parent=1 // pred_check_branch
      %76 = sbr.rel (0) target = $region21
    $region20: #{tpu_custom_call.1} parent=1 // pred_region
      _
    $region21: #{tpu_custom_call.1} parent=1 // pred_fallthru
      _
    // Predicated region
    $region22: #{tpu_custom_call.1} parent=1 // pred_check
      _
    $region23: #{tpu_custom_call.1} parent=1 // pred_check_branch
      %78 = sbr.rel (0) target = $region25
    $region24: #{tpu_custom_call.1} parent=1 // pred_region
      %80 = vsyncadd [#allocation9], 0
      %s81 = sshll.u32 %s5, 4
      %s82 = int_to_ptr.hbm [resolvable:$true] %s81
      %s83 = sshll.u32 [#allocation10], 4
      %s84 = int_to_ptr.vmem [resolvable:$true] %s83
      %89 = dma.hbm_to_vmem [thread:$0]  %s82, 256, %s84, [#allocation9], 64, 64, 4
    $region25: #{tpu_custom_call.1} parent=1 // pred_fallthru
      _
    // Predicated region
    $region26: #{tpu_custom_call.1} parent=1 // pred_check
      _
    $region27: #{tpu_custom_call.1} parent=1 // pred_check_branch
      %91 = sbr.rel (0) target = $region29
    $region28: #{tpu_custom_call.1} parent=1 // pred_region
      _
    $region29: #{tpu_custom_call.1} parent=1 // pred_fallthru
      _
    // Predicated region
    $region30: #{tpu_custom_call.1} parent=1 // pred_check
      _
    $region31: #{tpu_custom_call.1} parent=1 // pred_check_branch
      %93 = sbr.rel (0) target = $region33
    $region32: #{tpu_custom_call.1} parent=1 // pred_region
      %95 = vsyncadd [#allocation12], 0
      %s96 = sshll.u32 %s7, 4
      %s97 = int_to_ptr.hbm [resolvable:$true] %s96
      %s98 = sshll.u32 [#allocation11], 4
      %s99 = int_to_ptr.vmem [resolvable:$true] %s98
      %104 = dma.hbm_to_vmem [thread:$0]  %s97, 256, %s99, [#allocation12], 64, 64, 4
    $region33: #{tpu_custom_call.1} parent=1 // pred_fallthru
      _
    // Predicated region
    $region34: #{tpu_custom_call.1} parent=1 // pred_check
      _
    $region35: #{tpu_custom_call.1} parent=1 // pred_check_branch
      %106 = sbr.rel (0) target = $region37
    $region36: #{tpu_custom_call.1} parent=1 // pred_region
      _
    $region37: #{tpu_custom_call.1} parent=1 // pred_fallthru
      _
    // Predicated region
    $region38: #{tpu_custom_call.1} parent=1 // pred_check
      _
    $region39: #{tpu_custom_call.1} parent=1 // pred_check_branch
      %108 = sbr.rel (0) target = $region41
    $region40: #{tpu_custom_call.1} parent=1 // pred_region
      %110 = dma.done [#allocation3], 256
    $region41: #{tpu_custom_call.1} parent=1 // pred_fallthru
      _
    // Predicated region
    $region42: #{tpu_custom_call.1} parent=1 // pred_check
      _
    $region43: #{tpu_custom_call.1} parent=1 // pred_check_branch
      %112 = sbr.rel (0) target = $region45
    $region44: #{tpu_custom_call.1} parent=1 // pred_region
      %114 = dma.done [#allocation6], 256
    $region45: #{tpu_custom_call.1} parent=1 // pred_fallthru
      _
    // Predicated region
    $region46: #{tpu_custom_call.1} parent=1 // pred_check
      _
    $region47: #{tpu_custom_call.1} parent=1 // pred_check_branch
      %116 = sbr.rel (0) target = $region49
    $region48: #{tpu_custom_call.1} parent=1 // pred_region
      %118 = dma.done [#allocation6], 256
    $region49: #{tpu_custom_call.1} parent=1 // pred_fallthru
      _
    // Predicated region
    $region50: #{tpu_custom_call.1} parent=1 // pred_check
      _
    $region51: #{tpu_custom_call.1} parent=1 // pred_check_branch
      %120 = sbr.rel (0) target = $region53
    $region52: #{tpu_custom_call.1} parent=1 // pred_region
      %122 = dma.done [#allocation9], 256
    $region53: #{tpu_custom_call.1} parent=1 // pred_fallthru
      _
    // Predicated region
    $region54: #{tpu_custom_call.1} parent=1 // pred_check
      _
    $region55: #{tpu_custom_call.1} parent=1 // pred_check_branch
      %124 = sbr.rel (0) target = $region57
    $region56: #{tpu_custom_call.1} parent=1 // pred_region
      %126 = dma.done [#allocation9], 256
    $region57: #{tpu_custom_call.1} parent=1 // pred_fallthru
      _
    // Predicated region
    $region58: #{tpu_custom_call.1} parent=1 // pred_check
      _
    $region59: #{tpu_custom_call.1} parent=1 // pred_check_branch
      %128 = sbr.rel (0) target = $region61
    $region60: #{tpu_custom_call.1} parent=1 // pred_region
      %130 = dma.done [#allocation12], 256
    $region61: #{tpu_custom_call.1} parent=1 // pred_fallthru
      _
    %v132 = vld [vmem:[#allocation2] sm:$0xff]
    %v133 = vld [vmem:[#allocation2 + $0x8] sm:$0xff]
    %v134 = vpack.c.bf16 %v133, %v132
    %v135 = vld [vmem:[#allocation5] sm:$0xff]
    %v136 = vld [vmem:[#allocation5 + $0x8] sm:$0xff]
    %v137 = vpack.c.bf16 %v136, %v135
    %v138 = vld [vmem:[#allocation7] sm:$0xff]
    %v139 = vld [vmem:[#allocation7 + $0x8] sm:$0xff]
    %v140 = vpack.c.bf16 %v139, %v138
    %v141 = vld [vmem:[#allocation8] sm:$0xf]
    %v142 = vld [vmem:[#allocation8 + $0x4] sm:$0xf]
    %v143 = vld [vmem:[#allocation8 + $0x8] sm:$0xf]
    %v144 = vld [vmem:[#allocation8 + $0xc] sm:$0xf]
    %v145 = vld [vmem:[%s4] sm:$0x1]
    %v147 = vperm.slane %v145, 0
    %v153 = vunpack.c.l.b16 %v141
    %v154 = vunpack.c.l.b16 %v142
    %v155 = vunpack.c.l.b16 %v143
    %v156 = vunpack.c.l.b16 %v144
    %v157 = vpack.c.b16 %v154, %v153
    %v158 = vpack.c.b16 %v156, %v155
    %vm161 = vcmask 261120
    %v163 = vsel %vm161, %v134, 0
    %165 = vmatpush.bf16.msra.mxu0 0
    %166 = vmatpush.bf16.msra.mxu0 0
    %167 = vmatpush.bf16.msra.mxu0 0
    %168 = vmatpush.bf16.msra.mxu0 0
    %169 = vmatpush.bf16.msra.mxu0 0
    %170 = vmatpush.bf16.msra.mxu0 0
    %171 = vmatpush.bf16.msra.mxu0 %v158
    %172 = vmatpush.bf16.msra.mxu0 %v157
    %173 = vmatmul.bf16.gmra.mxu0 %v163
    %v174 = vpop.f32.mrf.mxu0
    %v175 = vadd.f32 %v147, %v174
    %v176 = vpop.f32.mrf.mxu0
    %v177 = vadd.f32 %v147, %v176
    %178 = vdwg.mxu0
    %v179 = vld [vmem:[#allocation10] sm:$0xf]
    %v180 = vld [vmem:[#allocation10 + $0x4] sm:$0xf]
    %v181 = vld [vmem:[#allocation10 + $0x8] sm:$0xf]
    %v182 = vld [vmem:[#allocation10 + $0xc] sm:$0xf]
    %v183 = vld [vmem:[%s6] sm:$0x1]
    %v185 = vperm.slane %v183, 0
    %v191 = vunpack.c.l.b16 %v179
    %v192 = vunpack.c.l.b16 %v180
    %v193 = vunpack.c.l.b16 %v181
    %v194 = vunpack.c.l.b16 %v182
    %v195 = vpack.c.b16 %v192, %v191
    %v196 = vpack.c.b16 %v194, %v193
    %v200 = vsel %vm161, %v137, 0
    %202 = vmatpush.bf16.msra.mxu0 0
    %203 = vmatpush.bf16.msra.mxu0 0
    %204 = vmatpush.bf16.msra.mxu0 0
    %205 = vmatpush.bf16.msra.mxu0 0
    %206 = vmatpush.bf16.msra.mxu0 0
    %207 = vmatpush.bf16.msra.mxu0 0
    %208 = vmatpush.bf16.msra.mxu0 %v196
    %209 = vmatpush.bf16.msra.mxu0 %v195
    %210 = vmatmul.bf16.gmra.mxu0 %v200
    %v211 = vpop.f32.mrf.mxu0
    %v212 = vadd.f32 %v185, %v211
    %v213 = vpop.f32.mrf.mxu0
    %v214 = vadd.f32 %v185, %v213
    %215 = vdwg.mxu0
    %v216 = vld [vmem:[#allocation11] sm:$0xf]
    %v217 = vld [vmem:[#allocation11 + $0x4] sm:$0xf]
    %v218 = vld [vmem:[#allocation11 + $0x8] sm:$0xf]
    %v219 = vld [vmem:[#allocation11 + $0xc] sm:$0xf]
    %v220 = vld [vmem:[%s8] sm:$0x1]
    %v222 = vperm.slane %v220, 0
    %v228 = vunpack.c.l.b16 %v216
    %v229 = vunpack.c.l.b16 %v217
    %v230 = vunpack.c.l.b16 %v218
    %v231 = vunpack.c.l.b16 %v219
    %v232 = vpack.c.b16 %v229, %v228
    %v233 = vpack.c.b16 %v231, %v230
    %v237 = vsel %vm161, %v140, 0
    %239 = vmatpush.bf16.msra.mxu0 0
    %240 = vmatpush.bf16.msra.mxu0 0
    %241 = vmatpush.bf16.msra.mxu0 0
    %242 = vmatpush.bf16.msra.mxu0 0
    %243 = vmatpush.bf16.msra.mxu0 0
    %244 = vmatpush.bf16.msra.mxu0 0
    %245 = vmatpush.bf16.msra.mxu0 %v233
    %246 = vmatpush.bf16.msra.mxu0 %v232
    %247 = vmatmul.bf16.gmra.mxu0 %v237
    %v248 = vpop.f32.mrf.mxu0
    %v249 = vadd.f32 %v222, %v248
    %v250 = vpop.f32.mrf.mxu0
    %v251 = vadd.f32 %v222, %v250
    %252 = vdwg.mxu0
    %v253 = vpack.c.bf16 %v175, %v175
    %v254 = vpack.c.bf16 %v177, %v177
    %vm255 = vcmask 257024
    %256 = vst.msk [vmem:[#allocation13] sm:$0xf] %vm255, %v253
    %257 = vst.msk [vmem:[#allocation13 + $0x4] sm:$0xf] %vm255, %v254
    %v258 = vpack.c.bf16 %v212, %v212
    %v259 = vpack.c.bf16 %v214, %v214
    %260 = vst.msk [vmem:[#allocation14] sm:$0xf] %vm255, %v258
    %261 = vst.msk [vmem:[#allocation14 + $0x4] sm:$0xf] %vm255, %v259
    %v262 = vpack.c.bf16 %v249, %v249
    %v263 = vpack.c.bf16 %v251, %v251
    %264 = vst.msk [vmem:[#allocation16] sm:$0xf] %vm255, %v262
    %265 = vst.msk [vmem:[#allocation16 + $0x4] sm:$0xf] %vm255, %v263
    // Predicated region
    $region62: #{tpu_custom_call.1} parent=1 // pred_check
      _
    $region63: #{tpu_custom_call.1} parent=1 // pred_check_branch
      %267 = sbr.rel (0) target = $region65
    $region64: #{tpu_custom_call.1} parent=1 // pred_region
      %269 = vsyncadd [#allocation4], 0
      %s270 = sshll.u32 [#allocation13], 4
      %s271 = int_to_ptr.vmem [resolvable:$true] %s270
      %s272 = sshll.u32 %s9, 4
      %s273 = int_to_ptr.hbm [resolvable:$true] %s272
      %278 = dma.vmem_to_hbm [thread:$0]  %s271, 128, %s273, [#allocation4], 64, 64, 4
    $region65: #{tpu_custom_call.1} parent=1 // pred_fallthru
      _
    // Predicated region
    $region66: #{tpu_custom_call.1} parent=1 // pred_check
      _
    $region67: #{tpu_custom_call.1} parent=1 // pred_check_branch
      %280 = sbr.rel (0) target = $region69
    $region68: #{tpu_custom_call.1} parent=1 // pred_region
      %282 = vsyncadd [#allocation15], 0
      %s283 = sshll.u32 [#allocation14], 4
      %s284 = int_to_ptr.vmem [resolvable:$true] %s283
      %s285 = sshll.u32 %s10, 4
      %s286 = int_to_ptr.hbm [resolvable:$true] %s285
      %291 = dma.vmem_to_hbm [thread:$0]  %s284, 128, %s286, [#allocation15], 64, 64, 4
    $region69: #{tpu_custom_call.1} parent=1 // pred_fallthru
      _
    // Predicated region
    $region70: #{tpu_custom_call.1} parent=1 // pred_check
      _
    $region71: #{tpu_custom_call.1} parent=1 // pred_check_branch
      %293 = sbr.rel (0) target = $region73
    $region72: #{tpu_custom_call.1} parent=1 // pred_region
      %295 = vsyncadd [#allocation15], 0
      %s296 = sshll.u32 [#allocation16], 4
      %s297 = int_to_ptr.vmem [resolvable:$true] %s296
      %s298 = sshll.u32 %s11, 4
      %s299 = int_to_ptr.hbm [resolvable:$true] %s298
      %304 = dma.vmem_to_hbm [thread:$0]  %s297, 128, %s299, [#allocation15], 64, 64, 4
    $region73: #{tpu_custom_call.1} parent=1 // pred_fallthru
      _
    // Predicated region
    $region74: #{tpu_custom_call.1} parent=1 // pred_check
      _
    $region75: #{tpu_custom_call.1} parent=1 // pred_check_branch
      %306 = sbr.rel (0) target = $region77
    $region76: #{tpu_custom_call.1} parent=1 // pred_region
      %308 = dma.done [#allocation4], 128
    $region77: #{tpu_custom_call.1} parent=1 // pred_fallthru
      _
    // Predicated region
    $region78: #{tpu_custom_call.1} parent=1 // pred_check
      _
    $region79: #{tpu_custom_call.1} parent=1 // pred_check_branch
      %310 = sbr.rel (0) target = $region81
    $region80: #{tpu_custom_call.1} parent=1 // pred_region
      %312 = dma.done [#allocation15], 128
    $region81: #{tpu_custom_call.1} parent=1 // pred_fallthru
      _
    // Predicated region
    $region82: #{tpu_custom_call.1} parent=1 // pred_check
      _
    $region83: #{tpu_custom_call.1} parent=1 // pred_check_branch
      %314 = sbr.rel (0) target = $region85
    $region84: #{tpu_custom_call.1} parent=1 // pred_region
      %316 = dma.done [#allocation15], 128
    $region85: #{tpu_custom_call.1} parent=1 // pred_fallthru
      _
    %317 = vsyncpa [#allocation3], 1
    %318 = vsyncpa [#allocation6], 1
    %319 = vsyncpa [#allocation9], 1
    %320 = vsyncpa [#allocation12], 1
    %321 = vsyncpa [#allocation4], 1
    %322 = vsyncpa [#allocation15], 1

</llo_original>
